<compile_context>
chip_gen: v6e
topology: v6e:2x2x1
jax: 0.10.0
libtpu: 0.0.40
codegen_flags: <defaults>
</compile_context>

<pallas_src>
import jax
import jax.numpy as jnp
from jax.experimental import pallas as pl
from jax.experimental.pallas import tpu as pltpu


# ----------------------------- slab layout -----------------------------------
def _slab_layout(in_channels, hidden_dim, num_classes):
    """All weights stacked on the sublane axis of one (rows, 4*Hd) f32 slab."""
    G4 = 4 * hidden_dim
    offs = {}
    r = 0

    def take(name, rows):
        nonlocal r
        offs[name] = r
        r = ((r + rows + 7) // 8) * 8       # keep every section 8-row aligned

    take('wih', in_channels)                # (C, 4Hd)   pre-scaled W_ih^T
    take('whh', G4)                         # (4Hd, 4Hd) zero-padded W_hh^T (rows 3Hd:4Hd)
    take('wt', G4)                          # (4Hd, 4Hd) zero-padded deconv weight
    take('b', 1)                            # (1, 4Hd)   pre-scaled b_ih + b_hh
    take('bt', 1)                           # (1, 4Hd)   deconv bias tiled x4
    take('w1', 4 * num_classes)             # (4NC, 4Hd) block-diag 1x1-conv weight
    return offs, r


# --------------------------- fused forward kernel ----------------------------
def _make_fused_kernel(T, B, C, Hd, NC, G, offs):
    """LSTM over T=H*W steps + ConvTranspose2d(k=2,s=2) + ReLU + 1x1 Conv."""
    G4 = 4 * Hd
    RG = B * G                  # rows per group (== 8, one sublane tile)
    NG = T // G                 # number of groups

    def kernel(x_ref, slab_ref, out_ref, gx_ref, y_ref):
        # x_ref:    (C, T*B)     lane-dense input, col n = t*B + b
        # slab_ref: (rows, 4Hd)  packed parameters (see _slab_layout)
        # out_ref:  (4*NC, T*B)  lane-dense logits (no 1x1 bias yet)
        # gx_ref:   VMEM (T*B, 4Hd) scratch: hoisted input projection
        # y_ref:    VMEM (T*B, 4Hd) scratch: post-ReLU deconv activations

        wih = slab_ref[offs['wih']:offs['wih'] + C, :]          # (C, 4Hd)
        b_row = slab_ref[offs['b']:offs['b'] + 1, :]            # (1, 4Hd)
        whh = slab_ref[offs['whh']:offs['whh'] + G4, :]         # (4Hd, 4Hd)

        # Post-tanh affine: sigmoid chunks (i,f,o) -> 0.5*t+0.5, g chunk -> t.
        # (The 0.5 pre-scale is already folded into wih/whh/b at pack time.)
        lane = jax.lax.broadcasted_iota(jnp.int32, (1, G4), 1)
        is_g = (lane >= 2 * Hd) & (lane < 3 * Hd)
        pm = jnp.where(is_g, 1.0, 0.5).astype(jnp.float32)
        pb = jnp.where(is_g, 0.0, 0.5).astype(jnp.float32)

        # ---- (1) hoisted input projection: one MXU matmul + bias -----------
        gx_ref[...] = jax.lax.dot_general(
            x_ref[...], wih, (((0,), (0,)), ((), ())),
            preferred_element_type=jnp.float32) + b_row

        # ---- (2) recurrence: fori over groups of G steps, body unrolled ----
        # State layout (full-width, no lane slicing on the serial chain):
        #   gate order [i | f | g | o] (PyTorch native); cell c valid in
        #   chunk 1 (f's lanes), hidden h valid in chunk 3 (o's lanes);
        #   the other chunks carry bounded garbage that multiplies the
        #   zero rows of whh / wt and therefore never leaks.
        def group(g, carry):
            h, c = carry
            base = pl.multiple_of(g * RG, RG)
            gx_blk = gx_ref[pl.ds(base, RG), :]                 # (8, 4Hd) aligned vld
            wtr = slab_ref[offs['wt']:offs['wt'] + G4, :]       # (4Hd, 4Hd)
            bt_row = slab_ref[offs['bt']:offs['bt'] + 1, :]     # (1, 4Hd)

            hs = []
            for s in range(G):
                gates = gx_blk[s * B:(s + 1) * B, :] + jnp.dot(
                    h, whh, preferred_element_type=jnp.float32)  # (B, 4Hd)
                # one EUP tanh for all four gates; affine turns i,f,o into sigmoids
                act = jnp.tanh(gates) * pm + pb
                # i*g lands on chunk 1 regardless of roll direction convention
                ig = (pltpu.roll(act, Hd, axis=1) *
                      pltpu.roll(act, 3 * Hd, axis=1))
                c = act * c + ig                                 # chunk1: f*c + i*g
                tc = pltpu.roll(jnp.tanh(c), 2 * Hd, axis=1)     # chunk3: tanh(c)
                h = act * tc                                     # chunk3: o*tanh(c)
                hs.append(h)

            # ---- fused deconv head, off the serial chain --------------------
            hblk = jnp.concatenate(hs, axis=0)                   # (8, 4Hd)
            yblk = jnp.maximum(
                jnp.dot(hblk, wtr, preferred_element_type=jnp.float32) + bt_row,
                0.0)
            y_ref[pl.ds(base, RG), :] = yblk                     # aligned lane-dense vst
            return h, c

        h0 = jnp.zeros((B, G4), jnp.float32)
        c0 = jnp.zeros((B, G4), jnp.float32)
        jax.lax.fori_loop(0, NG, group, (h0, c0))

        # ---- (3) 1x1-conv head, lane-dense output ---------------------------
        w1 = slab_ref[offs['w1']:offs['w1'] + 4 * NC, :]         # (4NC, 4Hd)
        out_ref[...] = jax.lax.dot_general(
            w1, y_ref[...], (((1,), (1,)), ((), ())),
            preferred_element_type=jnp.float32)                  # (4NC, T*B)

    return kernel


# --------------------------------- wrapper ------------------------------------
def mask_rcnn_predictor_lstm(x, packed, hidden_dim, num_classes):
    B, C, H, W = x.shape
    Hd, NC = hidden_dim, num_classes
    T = H * W
    N = T * B
    assert (4 * Hd) % 128 == 0, "gate block must be lane-aligned"
    assert 8 % B == 0, "batch must divide one sublane tile"
    G = 8 // B
    assert T % G == 0, "sequence length must divide the step-group size"

    # (B, C, H, W) -> (C, T, B) -> (C, T*B), col n = t*B + b   (lane-dense input)
    x_cn = jnp.transpose(x.reshape(B, C, T).astype(jnp.float32),
                         (1, 2, 0)).reshape(C, N)

    offs, slab_rows = _slab_layout(C, Hd, NC)
    kernel = _make_fused_kernel(T, B, C, Hd, NC, G, offs)

    out_t = pl.pallas_call(
        kernel,
        out_shape=jax.ShapeDtypeStruct((4 * NC, N), jnp.float32),
        grid=(1,),
        in_specs=[
            pl.BlockSpec((C, N), lambda i: (0, 0)),
            pl.BlockSpec((slab_rows, 4 * Hd), lambda i: (0, 0)),
        ],
        out_specs=pl.BlockSpec((4 * NC, N), lambda i: (0, 0)),
        scratch_shapes=[
            pltpu.VMEM((N, 4 * Hd), jnp.float32),   # input-projection slab
            pltpu.VMEM((N, 4 * Hd), jnp.float32),   # post-ReLU deconv activations
        ],
        compiler_params=pltpu.CompilerParams(
            dimension_semantics=("arbitrary",)),
    )(x_cn, packed['slab'])

    # (4*NC, T*B) -> (di, dj, c, i, j, b) -> (B, NC, 2H, 2W), then 1x1-conv bias
    quad = out_t.reshape(2, 2, NC, H, W, B)
    out = jnp.transpose(quad, (5, 2, 3, 0, 4, 1)).reshape(B, NC, 2 * H, 2 * W)
    return out + packed['b1'][None, :, None, None]


# -------------------- parameters (PyTorch layout) + packing -------------------
def init_raw_params(key, in_channels, hidden_dim, num_classes):
    """Parameters in the PyTorch module's native layout / gate order [i,f,g,o]."""
    ks = jax.random.split(key, 8)
    s = 0.1
    return {
        'w_ih': jax.random.normal(ks[0], (4 * hidden_dim, in_channels), jnp.float32) * s,
        'w_hh': jax.random.normal(ks[1], (4 * hidden_dim, hidden_dim), jnp.float32) * s,
        'b_ih': jax.random.normal(ks[2], (4 * hidden_dim,), jnp.float32) * s,
        'b_hh': jax.random.normal(ks[3], (4 * hidden_dim,), jnp.float32) * s,
        # ConvTranspose2d weight: (in_ch, out_ch, 2, 2)
        'wt':   jax.random.normal(ks[4], (hidden_dim, hidden_dim, 2, 2), jnp.float32) * s,
        'bt':   jax.random.normal(ks[5], (hidden_dim,), jnp.float32) * s,
        # Conv2d 1x1 weight: (num_classes, hidden_dim, 1, 1)
        'w1':   jax.random.normal(ks[6], (num_classes, hidden_dim, 1, 1), jnp.float32) * s,
        'b1':   jax.random.normal(ks[7], (num_classes,), jnp.float32) * s,
    }


def pack_params(raw, in_channels, hidden_dim, num_classes):
    """Pack all weights into one lane-dense slab.

    Gate order stays PyTorch-native [i, f, g, o].  The 0.5 pre-scale for the
    tanh-based sigmoid is folded into W_ih^T, W_hh^T and the LSTM bias.
    W_hh^T / the deconv weight are zero-padded to (4Hd, 4Hd) with their live
    rows in chunk 3 (where the full-width hidden state is valid)."""
    Hd, NC, C = hidden_dim, num_classes, in_channels
    G4 = 4 * Hd

    s4 = jnp.concatenate([jnp.full((Hd,), 0.5), jnp.full((Hd,), 0.5),
                          jnp.full((Hd,), 1.0), jnp.full((Hd,), 0.5)]
                         ).astype(jnp.float32)

    wih = raw['w_ih'].T * s4[None, :]                            # (C, 4Hd)
    whh_blk = raw['w_hh'].T * s4[None, :]                        # (Hd, 4Hd)
    b = ((raw['b_ih'] + raw['b_hh']) * s4)[None, :]              # (1, 4Hd)

    # deconv quadrants stacked on output columns: col = (di*2+dj)*Hd + oc
    wt_blk = jnp.transpose(raw['wt'], (0, 2, 3, 1)).reshape(Hd, G4)
    bt = jnp.tile(raw['bt'], 4)[None, :]                         # (1, 4Hd)

    # block-diagonal (transposed) 1x1-conv weight: (4*NC, 4*Hd)
    w1m = raw['w1'][:, :, 0, 0]                                  # (NC, Hd)
    w1bd = jnp.zeros((4 * NC, G4), jnp.float32)
    for q in range(4):
        w1bd = w1bd.at[q * NC:(q + 1) * NC, q * Hd:(q + 1) * Hd].set(w1m)

    offs, rows = _slab_layout(C, Hd, NC)
    slab = jnp.zeros((rows, G4), jnp.float32)
    slab = slab.at[offs['wih']:offs['wih'] + C].set(wih)
    slab = slab.at[offs['whh'] + 3 * Hd:offs['whh'] + 4 * Hd].set(whh_blk)
    slab = slab.at[offs['wt'] + 3 * Hd:offs['wt'] + 4 * Hd].set(wt_blk)
    slab = slab.at[offs['b']].set(b[0])
    slab = slab.at[offs['bt']].set(bt[0])
    slab = slab.at[offs['w1']:offs['w1'] + 4 * NC].set(w1bd)
    return {'slab': slab, 'b1': raw['b1']}


# ----------------------------- pure-JAX reference -----------------------------
def reference(x, raw, hidden_dim, num_classes):
    """Direct translation of the PyTorch module, using the raw parameters."""
    B, C, H, W = x.shape
    Hd = hidden_dim
    T = H * W
    x_seq = jnp.transpose(x.reshape(B, C, T), (2, 0, 1))         # (T, B, C)
    w_ih, w_hh = raw['w_ih'], raw['w_hh']
    bias = raw['b_ih'] + raw['b_hh']

    def step(carry, x_t):
        h, c = carry
        gates = x_t @ w_ih.T + h @ w_hh.T + bias
        i = jax.nn.sigmoid(gates[:, :Hd])
        f = jax.nn.sigmoid(gates[:, Hd:2 * Hd])
        g = jnp.tanh(gates[:, 2 * Hd:3 * Hd])
        o = jax.nn.sigmoid(gates[:, 3 * Hd:])
        c = f * c + i * g
        h = o * jnp.tanh(c)
        return (h, c), h

    init = (jnp.zeros((B, Hd), jnp.float32), jnp.zeros((B, Hd), jnp.float32))
    _, h_seq = jax.lax.scan(step, init, x_seq)                   # (T, B, Hd)
    feat = jnp.transpose(h_seq, (1, 2, 0)).reshape(B, Hd, H, W)

    # ConvTranspose2d(k=2, s=2)
    up = (jnp.einsum('bihw,iodx->bohdwx', feat, raw['wt'])
          + raw['bt'][None, :, None, None, None, None])
    up = jnp.maximum(up.reshape(B, Hd, 2 * H, 2 * W), 0.0)       # ReLU
    # 1x1 Conv2d
    out = (jnp.einsum('bohw,co->bchw', up, raw['w1'][:, :, 0, 0])
           + raw['b1'][None, :, None, None])
    return out


if __name__ == "__main__":
    key = jax.random.PRNGKey(0)
    kx, kp = jax.random.split(key)

    B, C, H, W = 2, 4, 8, 8          # input NCHW
    hidden_dim, num_classes = 32, 3

    x = jax.random.normal(kx, (B, C, H, W), jnp.float32)
    raw = init_raw_params(kp, C, hidden_dim, num_classes)
    packed = pack_params(raw, C, hidden_dim, num_classes)

    out = mask_rcnn_predictor_lstm(x, packed, hidden_dim, num_classes)
    jax.block_until_ready(out)

    ref = reference(x, raw, hidden_dim, num_classes)
    assert out.shape == (B, num_classes, 2 * H, 2 * W), out.shape
    assert jnp.allclose(out, ref, atol=1e-4, rtol=1e-4), "mismatch vs reference"

    print("KERNEL_OK")
</pallas_src>

<mosaic_0001>
module attributes {stable_mosaic.version = 11 : i64} {
  func.func @kernel(%arg0: i32, %arg1: memref<4x128xf32, #tpu.memory_space<vmem>>, %arg2: memref<296x128xf32, #tpu.memory_space<vmem>>, %arg3: memref<12x128xf32, #tpu.memory_space<vmem>>, %arg4: memref<128x128xf32, #tpu.memory_space<vmem>>, %arg5: memref<128x128xf32, #tpu.memory_space<vmem>>) attributes {dimension_semantics = [#tpu.dimension_semantics<arbitrary>], iteration_bounds = array<i64: 1>, scalar_prefetch = 0 : i64, scratch_operands = 2 : i64, tpu.core_type = #tpu.core_type<tc>, window_params = [{pipeline_mode = #tpu.pipeline_mode<synchronous>, transform_indices = @transform_0, window_bounds = array<i64: 4, 128>}, {pipeline_mode = #tpu.pipeline_mode<synchronous>, transform_indices = @transform_1, window_bounds = array<i64: 296, 128>}, {pipeline_mode = #tpu.pipeline_mode<synchronous>, transform_indices = @transform_2, window_bounds = array<i64: 12, 128>}]} {
    %c0 = arith.constant 0 : index
    %c0_0 = arith.constant 0 : index
    %0 = vector.load %arg2[%c0, %c0_0] : memref<296x128xf32, #tpu.memory_space<vmem>>, vector<4x128xf32>
    %c264 = arith.constant 264 : index
    %c0_1 = arith.constant 0 : index
    %1 = vector.load %arg2[%c264, %c0_1] : memref<296x128xf32, #tpu.memory_space<vmem>>, vector<1x128xf32>
    %c8 = arith.constant 8 : index
    %c0_2 = arith.constant 0 : index
    %2 = vector.load %arg2[%c8, %c0_2] : memref<296x128xf32, #tpu.memory_space<vmem>>, vector<128x128xf32>
    %3 = tpu.iota {dimensions = array<i32: 1>} : vector<1x128xi32>
    %c64_i32 = arith.constant 64 : i32
    %4 = vector.broadcast %c64_i32 : i32 to vector<1x128xi32>
    %5 = arith.cmpi sge, %3, %4 : vector<1x128xi32>
    %c96_i32 = arith.constant 96 : i32
    %6 = vector.broadcast %c96_i32 : i32 to vector<1x128xi32>
    %7 = arith.cmpi slt, %3, %6 : vector<1x128xi32>
    %8 = arith.andi %5, %7 : vector<1x128xi1>
    %cst = arith.constant 1.000000e+00 : f32
    %cst_3 = arith.constant 5.000000e-01 : f32
    %9 = vector.broadcast %cst : f32 to vector<1x128xf32>
    %10 = vector.broadcast %cst_3 : f32 to vector<1x128xf32>
    %11 = arith.select %8, %9, %10 : vector<1x128xi1>, vector<1x128xf32>
    %cst_4 = arith.constant 0.000000e+00 : f32
    %cst_5 = arith.constant 5.000000e-01 : f32
    %12 = vector.broadcast %cst_4 : f32 to vector<1x128xf32>
    %13 = vector.broadcast %cst_5 : f32 to vector<1x128xf32>
    %14 = arith.select %8, %12, %13 : vector<1x128xi1>, vector<1x128xf32>
    %c0_6 = arith.constant 0 : index
    %c0_7 = arith.constant 0 : index
    %15 = vector.load %arg1[%c0_6, %c0_7] : memref<4x128xf32, #tpu.memory_space<vmem>>, vector<4x128xf32>
    %cst_8 = arith.constant dense<0.000000e+00> : vector<128x128xf32>
    %16 = tpu.matmul %15, %0, %cst_8 {dimension_numbers = #tpu.dot_dimension_numbers<[0], [0], [1], [1], [0, 1, 1, 1], [], []>} : vector<4x128xf32>, vector<4x128xf32>, vector<128x128xf32> -> vector<128x128xf32>
    %17 = vector.broadcast %1 : vector<1x128xf32> to vector<128x128xf32>
    %18 = arith.addf %16, %17 : vector<128x128xf32>
    %c0_9 = arith.constant 0 : index
    %c0_10 = arith.constant 0 : index
    %19 = vector.load %arg4[%c0_9, %c0_10] : memref<128x128xf32, #tpu.memory_space<vmem>>, vector<128x128xf32>
    tpu.vector_store %arg4[%c0_9, %c0_10], %18 {strides = array<i32>} : memref<128x128xf32, #tpu.memory_space<vmem>>, vector<128x128xf32>,
    %cst_11 = arith.constant 0.000000e+00 : f32
    %20 = vector.broadcast %cst_11 : f32 to vector<2x128xf32>
    %cst_12 = arith.constant 0.000000e+00 : f32
    %21 = vector.broadcast %cst_12 : f32 to vector<2x128xf32>
    %c0_i32 = arith.constant 0 : i32
    %c16_i32 = arith.constant 16 : i32
    %22 = arith.addi %c0_i32, %c16_i32 : i32
    %c1_i32 = arith.constant 1 : i32
    %23:2 = scf.for %arg6 = %c0_i32 to %22 step %c1_i32 iter_args(%arg7 = %20, %arg8 = %21) -> (vector<2x128xf32>, vector<2x128xf32>)  : i32 {
      %c8_i32 = arith.constant 8 : i32
      %28 = arith.muli %arg6, %c8_i32 : i32
      %29 = tpu.assume_multiple %28, 8 : i32
      %30 = arith.index_cast %29 : i32 to index
      %c0_20 = arith.constant 0 : index
      %31 = vector.load %arg4[%30, %c0_20] : memref<128x128xf32, #tpu.memory_space<vmem>>, vector<8x128xf32>
      %c136 = arith.constant 136 : index
      %c0_21 = arith.constant 0 : index
      %32 = vector.load %arg2[%c136, %c0_21] : memref<296x128xf32, #tpu.memory_space<vmem>>, vector<128x128xf32>
      %c272 = arith.constant 272 : index
      %c0_22 = arith.constant 0 : index
      %33 = vector.load %arg2[%c272, %c0_22] : memref<296x128xf32, #tpu.memory_space<vmem>>, vector<1x128xf32>
      %34 = vector.extract_strided_slice %31 {offsets = [0, 0], sizes = [2, 128], strides = [1, 1]} : vector<8x128xf32> to vector<2x128xf32>
      %cst_23 = arith.constant dense<0.000000e+00> : vector<2x128xf32>
      %35 = tpu.matmul %arg7, %2, %cst_23 {dimension_numbers = #tpu.dot_dimension_numbers<[1], [0], [0], [1], [0, 0, 1, 1], [], []>} : vector<2x128xf32>, vector<128x128xf32>, vector<2x128xf32> -> vector<2x128xf32>
      %36 = arith.addf %34, %35 : vector<2x128xf32>
      %37 = math.tanh %36 : vector<2x128xf32>
      %38 = vector.broadcast %11 : vector<1x128xf32> to vector<2x128xf32>
      %39 = arith.mulf %37, %38 : vector<2x128xf32>
      %40 = vector.broadcast %14 : vector<1x128xf32> to vector<2x128xf32>
      %41 = arith.addf %39, %40 : vector<2x128xf32>
      %c32_i32 = arith.constant 32 : i32
      %42 = tpu.dynamic_rotate %41 by %c32_i32 dim 1 : vector<2x128xf32>, i32 -> vector<2x128xf32>
      %c96_i32_24 = arith.constant 96 : i32
      %43 = tpu.dynamic_rotate %41 by %c96_i32_24 dim 1 : vector<2x128xf32>, i32 -> vector<2x128xf32>
      %44 = arith.mulf %42, %43 : vector<2x128xf32>
      %45 = arith.mulf %41, %arg8 : vector<2x128xf32>
      %46 = arith.addf %45, %44 : vector<2x128xf32>
      %47 = math.tanh %46 : vector<2x128xf32>
      %c64_i32_25 = arith.constant 64 : i32
      %48 = tpu.dynamic_rotate %47 by %c64_i32_25 dim 1 : vector<2x128xf32>, i32 -> vector<2x128xf32>
      %49 = arith.mulf %41, %48 : vector<2x128xf32>
      %50 = vector.extract_strided_slice %31 {offsets = [2, 0], sizes = [2, 128], strides = [1, 1]} : vector<8x128xf32> to vector<2x128xf32>
      %cst_26 = arith.constant dense<0.000000e+00> : vector<2x128xf32>
      %51 = tpu.matmul %49, %2, %cst_26 {dimension_numbers = #tpu.dot_dimension_numbers<[1], [0], [0], [1], [0, 0, 1, 1], [], []>} : vector<2x128xf32>, vector<128x128xf32>, vector<2x128xf32> -> vector<2x128xf32>
      %52 = arith.addf %50, %51 : vector<2x128xf32>
      %53 = math.tanh %52 : vector<2x128xf32>
      %54 = vector.broadcast %11 : vector<1x128xf32> to vector<2x128xf32>
      %55 = arith.mulf %53, %54 : vector<2x128xf32>
      %56 = vector.broadcast %14 : vector<1x128xf32> to vector<2x128xf32>
      %57 = arith.addf %55, %56 : vector<2x128xf32>
      %c32_i32_27 = arith.constant 32 : i32
      %58 = tpu.dynamic_rotate %57 by %c32_i32_27 dim 1 : vector<2x128xf32>, i32 -> vector<2x128xf32>
      %c96_i32_28 = arith.constant 96 : i32
      %59 = tpu.dynamic_rotate %57 by %c96_i32_28 dim 1 : vector<2x128xf32>, i32 -> vector<2x128xf32>
      %60 = arith.mulf %58, %59 : vector<2x128xf32>
      %61 = arith.mulf %57, %46 : vector<2x128xf32>
      %62 = arith.addf %61, %60 : vector<2x128xf32>
      %63 = math.tanh %62 : vector<2x128xf32>
      %c64_i32_29 = arith.constant 64 : i32
      %64 = tpu.dynamic_rotate %63 by %c64_i32_29 dim 1 : vector<2x128xf32>, i32 -> vector<2x128xf32>
      %65 = arith.mulf %57, %64 : vector<2x128xf32>
      %66 = vector.extract_strided_slice %31 {offsets = [4, 0], sizes = [2, 128], strides = [1, 1]} : vector<8x128xf32> to vector<2x128xf32>
      %cst_30 = arith.constant dense<0.000000e+00> : vector<2x128xf32>
      %67 = tpu.matmul %65, %2, %cst_30 {dimension_numbers = #tpu.dot_dimension_numbers<[1], [0], [0], [1], [0, 0, 1, 1], [], []>} : vector<2x128xf32>, vector<128x128xf32>, vector<2x128xf32> -> vector<2x128xf32>
      %68 = arith.addf %66, %67 : vector<2x128xf32>
      %69 = math.tanh %68 : vector<2x128xf32>
      %70 = vector.broadcast %11 : vector<1x128xf32> to vector<2x128xf32>
      %71 = arith.mulf %69, %70 : vector<2x128xf32>
      %72 = vector.broadcast %14 : vector<1x128xf32> to vector<2x128xf32>
      %73 = arith.addf %71, %72 : vector<2x128xf32>
      %c32_i32_31 = arith.constant 32 : i32
      %74 = tpu.dynamic_rotate %73 by %c32_i32_31 dim 1 : vector<2x128xf32>, i32 -> vector<2x128xf32>
      %c96_i32_32 = arith.constant 96 : i32
      %75 = tpu.dynamic_rotate %73 by %c96_i32_32 dim 1 : vector<2x128xf32>, i32 -> vector<2x128xf32>
      %76 = arith.mulf %74, %75 : vector<2x128xf32>
      %77 = arith.mulf %73, %62 : vector<2x128xf32>
      %78 = arith.addf %77, %76 : vector<2x128xf32>
      %79 = math.tanh %78 : vector<2x128xf32>
      %c64_i32_33 = arith.constant 64 : i32
      %80 = tpu.dynamic_rotate %79 by %c64_i32_33 dim 1 : vector<2x128xf32>, i32 -> vector<2x128xf32>
      %81 = arith.mulf %73, %80 : vector<2x128xf32>
      %82 = vector.extract_strided_slice %31 {offsets = [6, 0], sizes = [2, 128], strides = [1, 1]} : vector<8x128xf32> to vector<2x128xf32>
      %cst_34 = arith.constant dense<0.000000e+00> : vector<2x128xf32>
      %83 = tpu.matmul %81, %2, %cst_34 {dimension_numbers = #tpu.dot_dimension_numbers<[1], [0], [0], [1], [0, 0, 1, 1], [], []>} : vector<2x128xf32>, vector<128x128xf32>, vector<2x128xf32> -> vector<2x128xf32>
      %84 = arith.addf %82, %83 : vector<2x128xf32>
      %85 = math.tanh %84 : vector<2x128xf32>
      %86 = vector.broadcast %11 : vector<1x128xf32> to vector<2x128xf32>
      %87 = arith.mulf %85, %86 : vector<2x128xf32>
      %88 = vector.broadcast %14 : vector<1x128xf32> to vector<2x128xf32>
      %89 = arith.addf %87, %88 : vector<2x128xf32>
      %c32_i32_35 = arith.constant 32 : i32
      %90 = tpu.dynamic_rotate %89 by %c32_i32_35 dim 1 : vector<2x128xf32>, i32 -> vector<2x128xf32>
      %c96_i32_36 = arith.constant 96 : i32
      %91 = tpu.dynamic_rotate %89 by %c96_i32_36 dim 1 : vector<2x128xf32>, i32 -> vector<2x128xf32>
      %92 = arith.mulf %90, %91 : vector<2x128xf32>
      %93 = arith.mulf %89, %78 : vector<2x128xf32>
      %94 = arith.addf %93, %92 : vector<2x128xf32>
      %95 = math.tanh %94 : vector<2x128xf32>
      %c64_i32_37 = arith.constant 64 : i32
      %96 = tpu.dynamic_rotate %95 by %c64_i32_37 dim 1 : vector<2x128xf32>, i32 -> vector<2x128xf32>
      %97 = arith.mulf %89, %96 : vector<2x128xf32>
      %98 = tpu.concatenate %49, %65, %81, %97 in 0 : vector<2x128xf32>, vector<2x128xf32>, vector<2x128xf32>, vector<2x128xf32> -> vector<8x128xf32>
      %cst_38 = arith.constant dense<0.000000e+00> : vector<8x128xf32>
      %99 = tpu.matmul %98, %32, %cst_38 {dimension_numbers = #tpu.dot_dimension_numbers<[1], [0], [0], [1], [0, 0, 1, 1], [], []>} : vector<8x128xf32>, vector<128x128xf32>, vector<8x128xf32> -> vector<8x128xf32>
      %100 = vector.broadcast %33 : vector<1x128xf32> to vector<8x128xf32>
      %101 = arith.addf %99, %100 : vector<8x128xf32>
      %cst_39 = arith.constant 0.000000e+00 : f32
      %102 = vector.broadcast %cst_39 : f32 to vector<8x128xf32>
      %103 = arith.maximumf %101, %102 : vector<8x128xf32>
      %104 = arith.index_cast %29 : i32 to index
      %c0_40 = arith.constant 0 : index
      %105 = vector.load %arg5[%104, %c0_40] : memref<128x128xf32, #tpu.memory_space<vmem>>, vector<8x128xf32>
      tpu.vector_store %arg5[%104, %c0_40], %103 {strides = array<i32>} : memref<128x128xf32, #tpu.memory_space<vmem>>, vector<8x128xf32>,
      scf.yield %97, %94 : vector<2x128xf32>, vector<2x128xf32>
    }
    %c16_i32_13 = arith.constant 16 : i32
    %c280 = arith.constant 280 : index
    %c0_14 = arith.constant 0 : index
    %24 = vector.load %arg2[%c280, %c0_14] : memref<296x128xf32, #tpu.memory_space<vmem>>, vector<12x128xf32>
    %c0_15 = arith.constant 0 : index
    %c0_16 = arith.constant 0 : index
    %25 = vector.load %arg5[%c0_15, %c0_16] : memref<128x128xf32, #tpu.memory_space<vmem>>, vector<128x128xf32>
    %cst_17 = arith.constant dense<0.000000e+00> : vector<12x128xf32>
    %26 = tpu.matmul %24, %25, %cst_17 {dimension_numbers = #tpu.dot_dimension_numbers<[1], [1], [0], [0], [0, 0, 1, 0], [], []>} : vector<12x128xf32>, vector<128x128xf32>, vector<12x128xf32> -> vector<12x128xf32>
    %c0_18 = arith.constant 0 : index
    %c0_19 = arith.constant 0 : index
    %27 = vector.load %arg3[%c0_18, %c0_19] : memref<12x128xf32, #tpu.memory_space<vmem>>, vector<12x128xf32>
    tpu.vector_store %arg3[%c0_18, %c0_19], %26 {strides = array<i32>} : memref<12x128xf32, #tpu.memory_space<vmem>>, vector<12x128xf32>,
    return
  }
  func.func @transform_0(%arg0: i32) -> (i32, i32) {
    %c0_i32 = arith.constant 0 : i32
    %c0_i32_0 = arith.constant 0 : i32
    %c0_i32_1 = arith.constant 0 : i32
    return %c0_i32, %c0_i32_0 : i32, i32
  }
  func.func @transform_1(%arg0: i32) -> (i32, i32) {
    %c0_i32 = arith.constant 0 : i32
    %c0_i32_0 = arith.constant 0 : i32
    %c0_i32_1 = arith.constant 0 : i32
    return %c0_i32, %c0_i32_0 : i32, i32
  }
  func.func @transform_2(%arg0: i32) -> (i32, i32) {
    %c0_i32 = arith.constant 0 : i32
    %c0_i32_0 = arith.constant 0 : i32
    %c0_i32_1 = arith.constant 0 : i32
    return %c0_i32, %c0_i32_0 : i32, i32
  }
}

</mosaic_0001>

<llo_original>
// kernel: tpu_custom_call.1
$region0: #{tpu_custom_call.1}
  #allocation0 [shape = 'u32[]', space=smem, size = 0x4, offset = 0x4, fixed_abs, tag = 'smem constant byte address 0x4 - core index']
  #allocation1 [shape = 'u32[144,128]{1,0:T(1,128)}', space=vmem, size = 0x12000, scoped, tag = 'internal scratch']
  #allocation2 [shape = 'f32[128,128]{1,0:T(8,128)}', space=vmem, size = 0x10000, scoped, tag = 'scratch operand']
  #allocation3 [shape = 'f32[128,128]{1,0:T(8,128)}', space=vmem, size = 0x10000, scoped, tag = 'scratch operand']
  %s0 = inlined_call_operand.hbm [shape: f32[4,128], index: 0, kind: input, shape index: {}]
  %s1 = inlined_call_operand.hbm [shape: f32[296,128], index: 1, kind: input, shape index: {}]
  %s2 = inlined_call_operand.hbm [shape: f32[12,128], index: 2, kind: output, shape index: {}]
  %s3 = sld [smem:[#allocation0]]
  $region33: #{tpu_custom_call.1} parent=0
    _
  %s5 = ssub.s32 1, %s3
  %s6 = scalar_select 0, %s5, %s3
  $region1: #{tpu_custom_call.1} parent=0
    #allocation4 [shape = 'u8[2048]{0}', space=vmem, size = 0x800, scoped, tag = 'input window, operand 0, single buffered']
    #allocation5 [shape = 's32[1]{0}', space=sflag, size = 0x4, scoped, tag = 'scoped memory for tpu_custom_call.1']
    #allocation6 [shape = 's32[1]{0}', space=sflag, size = 0x4, scoped, tag = 'scoped memory for tpu_custom_call.1']
    #allocation7 [shape = 'u8[151552]{0}', space=vmem, size = 0x25000, scoped, tag = 'input window, operand 1, single buffered']
    #allocation8 [shape = 's32[1]{0}', space=sflag, size = 0x4, scoped, tag = 'scoped memory for tpu_custom_call.1']
    #allocation9 [shape = 'u8[8192]{0}', space=vmem, size = 0x2000, scoped, tag = 'output window, operand 0, single buffered']
    %7 = vsyncpa [#allocation5], 0
    %8 = vsyncpa [#allocation8], 0
    %9 = vsyncpa [#allocation6], 0
    // Predicated region
    $region2: #{tpu_custom_call.1} parent=1 // pred_check
      _
    $region3: #{tpu_custom_call.1} parent=1 // pred_check_branch
      %11 = sbr.rel (0) target = $region5
    $region4: #{tpu_custom_call.1} parent=1 // pred_region
      %s13 = ssub.s32 64, 64
      %14 = vsyncadd [#allocation5], %s13
      %s16 = sshll.u32 [#allocation4], 4
      %s17 = int_to_ptr.vmem [resolvable:$true] %s16
      %19 = dma.hbm_to_vmem [thread:$0]  %s0, 64, %s17, [#allocation5]
    $region5: #{tpu_custom_call.1} parent=1 // pred_fallthru
      _
    // Predicated region
    $region6: #{tpu_custom_call.1} parent=1 // pred_check
      _
    $region7: #{tpu_custom_call.1} parent=1 // pred_check_branch
      %21 = sbr.rel (0) target = $region9
    $region8: #{tpu_custom_call.1} parent=1 // pred_region
      %s23 = ssub.s32 4736, 4736
      %24 = vsyncadd [#allocation8], %s23
      %s25 = sshll.u32 [#allocation7], 4
      %s26 = int_to_ptr.vmem [resolvable:$true] %s25
      %31 = dma.hbm_to_vmem [thread:$0]  %s1, 4736, %s26, [#allocation8], 128, 128, 8
    $region9: #{tpu_custom_call.1} parent=1 // pred_fallthru
      _
    // Predicated region
    $region10: #{tpu_custom_call.1} parent=1 // pred_check
      _
    $region11: #{tpu_custom_call.1} parent=1 // pred_check_branch
      %33 = sbr.rel (0) target = $region13
    $region12: #{tpu_custom_call.1} parent=1 // pred_region
      %34 = dma.done [#allocation5], 64
    $region13: #{tpu_custom_call.1} parent=1 // pred_fallthru
      _
    // Predicated region
    $region14: #{tpu_custom_call.1} parent=1 // pred_check
      _
    $region15: #{tpu_custom_call.1} parent=1 // pred_check_branch
      %36 = sbr.rel (0) target = $region17
    $region16: #{tpu_custom_call.1} parent=1 // pred_region
      %37 = dma.done [#allocation8], 4736
    $region17: #{tpu_custom_call.1} parent=1 // pred_fallthru
      _
    %v38 = vld [vmem:[#allocation7] sm:$0xf]
    %v39 = vld [vmem:[#allocation7 + $0x108] sm:$0x1]
    %v40 = vld [vmem:[#allocation7 + $0x8] sm:$0xff]
    %v41 = vld [vmem:[#allocation7 + $0x10] sm:$0xff]
    %v42 = vld [vmem:[#allocation7 + $0x18] sm:$0xff]
    %v43 = vld [vmem:[#allocation7 + $0x20] sm:$0xff]
    %v44 = vld [vmem:[#allocation7 + $0x28] sm:$0xff]
    %v45 = vld [vmem:[#allocation7 + $0x30] sm:$0xff]
    %v46 = vld [vmem:[#allocation7 + $0x38] sm:$0xff]
    %v47 = vld [vmem:[#allocation7 + $0x40] sm:$0xff]
    %v48 = vld [vmem:[#allocation7 + $0x48] sm:$0xff]
    %v49 = vld [vmem:[#allocation7 + $0x50] sm:$0xff]
    %v50 = vld [vmem:[#allocation7 + $0x58] sm:$0xff]
    %v51 = vld [vmem:[#allocation7 + $0x60] sm:$0xff]
    %v52 = vld [vmem:[#allocation7 + $0x68] sm:$0xff]
    %v53 = vld [vmem:[#allocation7 + $0x70] sm:$0xff]
    %v54 = vld [vmem:[#allocation7 + $0x78] sm:$0xff]
    %v55 = vld [vmem:[#allocation7 + $0x80] sm:$0xff]
    %v56 = vlaneseq
    %v57 = vand.u32 %v56, 127
    %vm58 = vcmp.ge.s32.totalorder %v57, 64
    %vm59 = vcmp.lt.s32.totalorder %v57, 96
    %vm60 = vmand %vm58, %vm59
    %v61 = vsel %vm60, 1.0, 0.5
    %v62 = vsel %vm60, 0.0, 0.5
    %v63 = vld [vmem:[#allocation4] sm:$0xf]
    %v64 = vlaneseq
    %v65 = vshrl.u32 %v64, 7
    %v66 = vsub.s32 0, %v65
    %v67 = vrot.slane %v39, %v66
    %68 = vxpose.xlu0.b32.start [1/16] %v63, 128
    %69 = vxpose.xlu0.b32.cont [2/16] 0.0, 128
    %70 = vxpose.xlu0.b32.cont [3/16] 0.0, 128
    %71 = vxpose.xlu0.b32.cont [4/16] 0.0, 128
    %72 = vxpose.xlu0.b32.cont [5/16] 0.0, 128
    %73 = vxpose.xlu0.b32.cont [6/16] 0.0, 128
    %74 = vxpose.xlu0.b32.cont [7/16] 0.0, 128
    %75 = vxpose.xlu0.b32.cont [8/16] 0.0, 128
    %76 = vxpose.xlu0.b32.cont [9/16] 0.0, 128
    %77 = vxpose.xlu0.b32.cont [10/16] 0.0, 128
    %78 = vxpose.xlu0.b32.cont [11/16] 0.0, 128
    %79 = vxpose.xlu0.b32.cont [12/16] 0.0, 128
    %80 = vxpose.xlu0.b32.cont [13/16] 0.0, 128
    %81 = vxpose.xlu0.b32.cont [14/16] 0.0, 128
    %82 = vxpose.xlu0.b32.cont [15/16] 0.0, 128
    %83 = vxpose.xlu0.b32.end [16/16] 0.0, 128
    %v84 = vpop.trf.xlu0
    %v85 = vpop.trf.xlu0
    %v86 = vpop.trf.xlu0
    %v87 = vpop.trf.xlu0
    %v88 = vpop.trf.xlu0
    %v89 = vpop.trf.xlu0
    %v90 = vpop.trf.xlu0
    %v91 = vpop.trf.xlu0
    %v92 = vpop.trf.xlu0
    %v93 = vpop.trf.xlu0
    %v94 = vpop.trf.xlu0
    %v95 = vpop.trf.xlu0
    %v96 = vpop.trf.xlu0
    %v97 = vpop.trf.xlu0
    %v98 = vpop.trf.xlu0
    %v99 = vpop.trf.xlu0
    %vm100 = vcmask 31744
    %v102 = vsel %vm100, %v84, 0
    %v105 = vsel %vm100, %v85, 0
    %v108 = vsel %vm100, %v86, 0
    %v111 = vsel %vm100, %v87, 0
    %v114 = vsel %vm100, %v88, 0
    %v117 = vsel %vm100, %v89, 0
    %v120 = vsel %vm100, %v90, 0
    %v123 = vsel %vm100, %v91, 0
    %v126 = vsel %vm100, %v92, 0
    %v129 = vsel %vm100, %v93, 0
    %v132 = vsel %vm100, %v94, 0
    %v135 = vsel %vm100, %v95, 0
    %v138 = vsel %vm100, %v96, 0
    %v141 = vsel %vm100, %v97, 0
    %v144 = vsel %vm100, %v98, 0
    %v147 = vsel %vm100, %v99, 0
    %vm149 = vcmask 1043456
    %v151 = vsel %vm149, %v38, 0
    %153 = vmatprep.subr.mxu0 0.0
    %154 = vmatpush1.msra.mxu0 0.0
    %155 = vmatprep.subr.mxu0 0.0
    %156 = vmatpush1.msra.mxu0 0.0
    %157 = vmatprep.subr.mxu0 0.0
    %158 = vmatpush1.msra.mxu0 0.0
    %159 = vmatprep.subr.mxu0 0.0
    %160 = vmatpush1.msra.mxu0 0.0
    %161 = vmatprep.subr.mxu0 0.0
    %162 = vmatpush1.msra.mxu0 0.0
    %163 = vmatprep.subr.mxu0 0.0
    %164 = vmatpush1.msra.mxu0 0.0
    %165 = vmatprep.subr.mxu0 0.0
    %166 = vmatpush1.msra.mxu0 0.0
    %167 = vmatprep.subr.mxu0 0.0
    %168 = vmatpush1.msra.mxu0 0.0
    %169 = vmatprep.subr.mxu0 0.0
    %170 = vmatpush1.msra.mxu0 0.0
    %171 = vmatprep.subr.mxu0 0.0
    %172 = vmatpush1.msra.mxu0 0.0
    %173 = vmatprep.subr.mxu0 0.0
    %174 = vmatpush1.msra.mxu0 0.0
    %175 = vmatprep.subr.mxu0 0.0
    %176 = vmatpush1.msra.mxu0 0.0
    %177 = vmatprep.subr.mxu0 0.0
    %178 = vmatpush1.msra.mxu0 0.0
    %179 = vmatprep.subr.mxu0 0.0
    %180 = vmatpush1.msra.mxu0 0.0
    %181 = vmatprep.subr.mxu0 0.0
    %182 = vmatpush1.msra.mxu0 0.0
    %183 = vmatprep.subr.mxu0 0.0
    %184 = vmatpush1.msra.mxu0 %v151
    %185 = vmatprep.subr.mxu0 0.0
    %186 = vmatpush2.msra.mxu0 0.0
    %187 = vmatprep.subr.mxu0 0.0
    %188 = vmatpush2.msra.mxu0 0.0
    %189 = vmatprep.subr.mxu0 0.0
    %190 = vmatpush2.msra.mxu0 0.0
    %191 = vmatprep.subr.mxu0 0.0
    %192 = vmatpush2.msra.mxu0 0.0
    %193 = vmatprep.subr.mxu0 0.0
    %194 = vmatpush2.msra.mxu0 0.0
    %195 = vmatprep.subr.mxu0 0.0
    %196 = vmatpush2.msra.mxu0 0.0
    %197 = vmatprep.subr.mxu0 0.0
    %198 = vmatpush2.msra.mxu0 0.0
    %199 = vmatprep.subr.mxu0 0.0
    %200 = vmatpush2.msra.mxu0 0.0
    %201 = vmatprep.subr.mxu0 0.0
    %202 = vmatpush2.msra.mxu0 0.0
    %203 = vmatprep.subr.mxu0 0.0
    %204 = vmatpush2.msra.mxu0 0.0
    %205 = vmatprep.subr.mxu0 0.0
    %206 = vmatpush2.msra.mxu0 0.0
    %207 = vmatprep.subr.mxu0 0.0
    %208 = vmatpush2.msra.mxu0 0.0
    %209 = vmatprep.subr.mxu0 0.0
    %210 = vmatpush2.msra.mxu0 0.0
    %211 = vmatprep.subr.mxu0 0.0
    %212 = vmatpush2.msra.mxu0 0.0
    %213 = vmatprep.subr.mxu0 0.0
    %214 = vmatpush2.msra.mxu0 0.0
    %215 = vmatprep.subr.mxu0 0.0
    %216 = vmatpush2.msra.mxu0 0.0
    %217 = vmatprep.mubr.f32.mxu0 0.0
    %218 = vmatmul.mubr.f32.gmra.mxu0 %v102
    %v219 = vpop.f32.mrf.mxu0
    %v220 = vadd.f32 %v67, %v219
    %v221 = vpop.f32.mrf.mxu0
    %222 = vmatprep.mubr.f32.mxu0 0.0
    %223 = vmatmul.mubr.f32.gmra.mxu0 %v105
    %v224 = vpop.f32.mrf.mxu0
    %v225 = vadd.f32 %v67, %v224
    %v226 = vpop.f32.mrf.mxu0
    %227 = vmatprep.mubr.f32.mxu0 0.0
    %228 = vmatmul.mubr.f32.gmra.mxu0 %v108
    %v229 = vpop.f32.mrf.mxu0
    %v230 = vadd.f32 %v67, %v229
    %v231 = vpop.f32.mrf.mxu0
    %232 = vmatprep.mubr.f32.mxu0 0.0
    %233 = vmatmul.mubr.f32.gmra.mxu0 %v111
    %v234 = vpop.f32.mrf.mxu0
    %v235 = vadd.f32 %v67, %v234
    %v236 = vpop.f32.mrf.mxu0
    %237 = vmatprep.mubr.f32.mxu0 0.0
    %238 = vmatmul.mubr.f32.gmra.mxu0 %v114
    %v239 = vpop.f32.mrf.mxu0
    %v240 = vadd.f32 %v67, %v239
    %v241 = vpop.f32.mrf.mxu0
    %242 = vmatprep.mubr.f32.mxu0 0.0
    %243 = vmatmul.mubr.f32.gmra.mxu0 %v117
    %v244 = vpop.f32.mrf.mxu0
    %v245 = vadd.f32 %v67, %v244
    %v246 = vpop.f32.mrf.mxu0
    %247 = vmatprep.mubr.f32.mxu0 0.0
    %248 = vmatmul.mubr.f32.gmra.mxu0 %v120
    %v249 = vpop.f32.mrf.mxu0
    %v250 = vadd.f32 %v67, %v249
    %v251 = vpop.f32.mrf.mxu0
    %252 = vmatprep.mubr.f32.mxu0 0.0
    %253 = vmatmul.mubr.f32.gmra.mxu0 %v123
    %v254 = vpop.f32.mrf.mxu0
    %v255 = vadd.f32 %v67, %v254
    %v256 = vpop.f32.mrf.mxu0
    %257 = vmatprep.mubr.f32.mxu0 0.0
    %258 = vmatmul.mubr.f32.gmra.mxu0 %v126
    %v259 = vpop.f32.mrf.mxu0
    %v260 = vadd.f32 %v67, %v259
    %v261 = vpop.f32.mrf.mxu0
    %262 = vmatprep.mubr.f32.mxu0 0.0
    %263 = vmatmul.mubr.f32.gmra.mxu0 %v129
    %v264 = vpop.f32.mrf.mxu0
    %v265 = vadd.f32 %v67, %v264
    %v266 = vpop.f32.mrf.mxu0
    %267 = vmatprep.mubr.f32.mxu0 0.0
    %268 = vmatmul.mubr.f32.gmra.mxu0 %v132
    %v269 = vpop.f32.mrf.mxu0
    %v270 = vadd.f32 %v67, %v269
    %v271 = vpop.f32.mrf.mxu0
    %272 = vmatprep.mubr.f32.mxu0 0.0
    %273 = vmatmul.mubr.f32.gmra.mxu0 %v135
    %v274 = vpop.f32.mrf.mxu0
    %v275 = vadd.f32 %v67, %v274
    %v276 = vpop.f32.mrf.mxu0
    %277 = vmatprep.mubr.f32.mxu0 0.0
    %278 = vmatmul.mubr.f32.gmra.mxu0 %v138
    %v279 = vpop.f32.mrf.mxu0
    %v280 = vadd.f32 %v67, %v279
    %v281 = vpop.f32.mrf.mxu0
    %282 = vmatprep.mubr.f32.mxu0 0.0
    %283 = vmatmul.mubr.f32.gmra.mxu0 %v141
    %v284 = vpop.f32.mrf.mxu0
    %v285 = vadd.f32 %v67, %v284
    %v286 = vpop.f32.mrf.mxu0
    %287 = vmatprep.mubr.f32.mxu0 0.0
    %288 = vmatmul.mubr.f32.gmra.mxu0 %v144
    %v289 = vpop.f32.mrf.mxu0
    %v290 = vadd.f32 %v67, %v289
    %v291 = vpop.f32.mrf.mxu0
    %292 = vmatprep.mubr.f32.mxu0 0.0
    %293 = vmatmul.mubr.f32.gmra.mxu0 %v147
    %v294 = vpop.f32.mrf.mxu0
    %v295 = vadd.f32 %v67, %v294
    %v296 = vpop.f32.mrf.mxu0
    %297 = vdwg.mxu0
    %298 = vst [vmem:[#allocation2] sm:$0xff] %v220
    %299 = vst [vmem:[#allocation2 + $0x8] sm:$0xff] %v225
    %300 = vst [vmem:[#allocation2 + $0x10] sm:$0xff] %v230
    %301 = vst [vmem:[#allocation2 + $0x18] sm:$0xff] %v235
    %302 = vst [vmem:[#allocation2 + $0x20] sm:$0xff] %v240
    %303 = vst [vmem:[#allocation2 + $0x28] sm:$0xff] %v245
    %304 = vst [vmem:[#allocation2 + $0x30] sm:$0xff] %v250
    %305 = vst [vmem:[#allocation2 + $0x38] sm:$0xff] %v255
    %306 = vst [vmem:[#allocation2 + $0x40] sm:$0xff] %v260
    %307 = vst [vmem:[#allocation2 + $0x48] sm:$0xff] %v265
    %308 = vst [vmem:[#allocation2 + $0x50] sm:$0xff] %v270
    %309 = vst [vmem:[#allocation2 + $0x58] sm:$0xff] %v275
    %310 = vst [vmem:[#allocation2 + $0x60] sm:$0xff] %v280
    %311 = vst [vmem:[#allocation2 + $0x68] sm:$0xff] %v285
    %312 = vst [vmem:[#allocation2 + $0x70] sm:$0xff] %v290
    %313 = vst [vmem:[#allocation2 + $0x78] sm:$0xff] %v295
    loop: start=0, step=1, limit=16
    $region18: #{tpu_custom_call.1} parent=1 // loop_pre_header
      _
    $region19: #{tpu_custom_call.1} parent=1 // loop_header
      %s315 = sphi 0, %s319
      %p316 = scmp.ge.s32.totalorder %s315, 16
      %v320 = vphi 0.0, %v747
      %v321 = vphi 0.0, %v737
    $region20: #{tpu_custom_call.1} parent=1 // loop_header_branch
      %318 = sbr.rel (%p316) target = $region24
    $region21: #{tpu_custom_call.1} parent=1 // loop_body
      %s322 = smul.u32 %s315, 8
      %s323 = scalar_lea.vmem [#allocation2], %s322
      %v324 = vld [vmem:[%s323] sm:$0xff]
      %v325 = vld [vmem:[#allocation7 + $0x88] sm:$0xff]
      %v326 = vld [vmem:[#allocation7 + $0x90] sm:$0xff]
      %v327 = vld [vmem:[#allocation7 + $0x98] sm:$0xff]
      %v328 = vld [vmem:[#allocation7 + $0xa0] sm:$0xff]
      %v329 = vld [vmem:[#allocation7 + $0xa8] sm:$0xff]
      %v330 = vld [vmem:[#allocation7 + $0xb0] sm:$0xff]
      %v331 = vld [vmem:[#allocation7 + $0xb8] sm:$0xff]
      %v332 = vld [vmem:[#allocation7 + $0xc0] sm:$0xff]
      %v333 = vld [vmem:[#allocation7 + $0xc8] sm:$0xff]
      %v334 = vld [vmem:[#allocation7 + $0xd0] sm:$0xff]
      %v335 = vld [vmem:[#allocation7 + $0xd8] sm:$0xff]
      %v336 = vld [vmem:[#allocation7 + $0xe0] sm:$0xff]
      %v337 = vld [vmem:[#allocation7 + $0xe8] sm:$0xff]
      %v338 = vld [vmem:[#allocation7 + $0xf0] sm:$0xff]
      %v339 = vld [vmem:[#allocation7 + $0xf8] sm:$0xff]
      %v340 = vld [vmem:[#allocation7 + $0x100] sm:$0xff]
      %v341 = vld [vmem:[#allocation7 + $0x110] sm:$0x1]
      %v343 = vrot.slane %v320, 6
      %345 = vmatprep.subr.mxu0 0.0
      %346 = vmatpush1.msra.mxu0 %v55
      %347 = vmatprep.subr.mxu0 0.0
      %348 = vmatpush1.msra.mxu0 %v54
      %349 = vmatprep.subr.mxu0 0.0
      %350 = vmatpush1.msra.mxu0 %v53
      %351 = vmatprep.subr.mxu0 0.0
      %352 = vmatpush1.msra.mxu0 %v52
      %353 = vmatprep.subr.mxu0 0.0
      %354 = vmatpush1.msra.mxu0 %v51
      %355 = vmatprep.subr.mxu0 0.0
      %356 = vmatpush1.msra.mxu0 %v50
      %357 = vmatprep.subr.mxu0 0.0
      %358 = vmatpush1.msra.mxu0 %v49
      %359 = vmatprep.subr.mxu0 0.0
      %360 = vmatpush1.msra.mxu0 %v48
      %361 = vmatprep.subr.mxu0 0.0
      %362 = vmatpush1.msra.mxu0 %v47
      %363 = vmatprep.subr.mxu0 0.0
      %364 = vmatpush1.msra.mxu0 %v46
      %365 = vmatprep.subr.mxu0 0.0
      %366 = vmatpush1.msra.mxu0 %v45
      %367 = vmatprep.subr.mxu0 0.0
      %368 = vmatpush1.msra.mxu0 %v44
      %369 = vmatprep.subr.mxu0 0.0
      %370 = vmatpush1.msra.mxu0 %v43
      %371 = vmatprep.subr.mxu0 0.0
      %372 = vmatpush1.msra.mxu0 %v42
      %373 = vmatprep.subr.mxu0 0.0
      %374 = vmatpush1.msra.mxu0 %v41
      %375 = vmatprep.subr.mxu0 0.0
      %376 = vmatpush1.msra.mxu0 %v40
      %377 = vmatprep.subr.mxu0 0.0
      %378 = vmatpush2.msra.mxu0 0.0
      %379 = vmatprep.subr.mxu0 0.0
      %380 = vmatpush2.msra.mxu0 0.0
      %381 = vmatprep.subr.mxu0 0.0
      %382 = vmatpush2.msra.mxu0 0.0
      %383 = vmatprep.subr.mxu0 0.0
      %384 = vmatpush2.msra.mxu0 0.0
      %385 = vmatprep.subr.mxu0 0.0
      %386 = vmatpush2.msra.mxu0 0.0
      %387 = vmatprep.subr.mxu0 0.0
      %388 = vmatpush2.msra.mxu0 0.0
      %389 = vmatprep.subr.mxu0 0.0
      %390 = vmatpush2.msra.mxu0 0.0
      %391 = vmatprep.subr.mxu0 0.0
      %392 = vmatpush2.msra.mxu0 0.0
      %393 = vmatprep.subr.mxu0 0.0
      %394 = vmatpush2.msra.mxu0 0.0
      %395 = vmatprep.subr.mxu0 0.0
      %396 = vmatpush2.msra.mxu0 0.0
      %397 = vmatprep.subr.mxu0 0.0
      %398 = vmatpush2.msra.mxu0 0.0
      %399 = vmatprep.subr.mxu0 0.0
      %400 = vmatpush2.msra.mxu0 0.0
      %401 = vmatprep.subr.mxu0 0.0
      %402 = vmatpush2.msra.mxu0 0.0
      %403 = vmatprep.subr.mxu0 0.0
      %404 = vmatpush2.msra.mxu0 0.0
      %405 = vmatprep.subr.mxu0 0.0
      %406 = vmatpush2.msra.mxu0 0.0
      %407 = vmatprep.subr.mxu0 0.0
      %408 = vmatpush2.msra.mxu0 0.0
      %409 = vmatprep.mubr.f32.mxu0 0.0
      %410 = vmatmul.mubr.f32.gmra.mxu0 %v343
      %v411 = vpop.f32.mrf.mxu0
      %v412 = vadd.f32 0.0, %v411
      %v413 = vpop.f32.mrf.mxu0
      %414 = vdwg.mxu0
      %v415 = vadd.f32 %v324, %v412
      %v416 = vtanh.pop %v415
      %v417 = vmul.f32 %v416, %v61
      %v418 = vadd.f32 %v417, %v62
      %419 = vrot.lane.b32.xlu0 %v418, 32
      %v420 = vpop.permute.xlu0 %419
      %421 = vrot.lane.b32.xlu0 %v418, 96
      %v422 = vpop.permute.xlu0 %421
      %v423 = vmul.f32 %v420, %v422
      %v425 = vrot.slane %v321, 6
      %v427 = vmul.f32 %v418, %v425
      %v428 = vadd.f32 %v427, %v423
      %v429 = vtanh.pop %v428
      %430 = vrot.lane.b32.xlu0 %v429, 64
      %v431 = vpop.permute.xlu0 %430
      %v432 = vmul.f32 %v418, %v431
      %433 = vmatprep.subr.mxu0 0.0
      %434 = vmatpush1.msra.mxu0 %v55
      %435 = vmatprep.subr.mxu0 0.0
      %436 = vmatpush1.msra.mxu0 %v54
      %437 = vmatprep.subr.mxu0 0.0
      %438 = vmatpush1.msra.mxu0 %v53
      %439 = vmatprep.subr.mxu0 0.0
      %440 = vmatpush1.msra.mxu0 %v52
      %441 = vmatprep.subr.mxu0 0.0
      %442 = vmatpush1.msra.mxu0 %v51
      %443 = vmatprep.subr.mxu0 0.0
      %444 = vmatpush1.msra.mxu0 %v50
      %445 = vmatprep.subr.mxu0 0.0
      %446 = vmatpush1.msra.mxu0 %v49
      %447 = vmatprep.subr.mxu0 0.0
      %448 = vmatpush1.msra.mxu0 %v48
      %449 = vmatprep.subr.mxu0 0.0
      %450 = vmatpush1.msra.mxu0 %v47
      %451 = vmatprep.subr.mxu0 0.0
      %452 = vmatpush1.msra.mxu0 %v46
      %453 = vmatprep.subr.mxu0 0.0
      %454 = vmatpush1.msra.mxu0 %v45
      %455 = vmatprep.subr.mxu0 0.0
      %456 = vmatpush1.msra.mxu0 %v44
      %457 = vmatprep.subr.mxu0 0.0
      %458 = vmatpush1.msra.mxu0 %v43
      %459 = vmatprep.subr.mxu0 0.0
      %460 = vmatpush1.msra.mxu0 %v42
      %461 = vmatprep.subr.mxu0 0.0
      %462 = vmatpush1.msra.mxu0 %v41
      %463 = vmatprep.subr.mxu0 0.0
      %464 = vmatpush1.msra.mxu0 %v40
      %465 = vmatprep.subr.mxu0 0.0
      %466 = vmatpush2.msra.mxu0 0.0
      %467 = vmatprep.subr.mxu0 0.0
      %468 = vmatpush2.msra.mxu0 0.0
      %469 = vmatprep.subr.mxu0 0.0
      %470 = vmatpush2.msra.mxu0 0.0
      %471 = vmatprep.subr.mxu0 0.0
      %472 = vmatpush2.msra.mxu0 0.0
      %473 = vmatprep.subr.mxu0 0.0
      %474 = vmatpush2.msra.mxu0 0.0
      %475 = vmatprep.subr.mxu0 0.0
      %476 = vmatpush2.msra.mxu0 0.0
      %477 = vmatprep.subr.mxu0 0.0
      %478 = vmatpush2.msra.mxu0 0.0
      %479 = vmatprep.subr.mxu0 0.0
      %480 = vmatpush2.msra.mxu0 0.0
      %481 = vmatprep.subr.mxu0 0.0
      %482 = vmatpush2.msra.mxu0 0.0
      %483 = vmatprep.subr.mxu0 0.0
      %484 = vmatpush2.msra.mxu0 0.0
      %485 = vmatprep.subr.mxu0 0.0
      %486 = vmatpush2.msra.mxu0 0.0
      %487 = vmatprep.subr.mxu0 0.0
      %488 = vmatpush2.msra.mxu0 0.0
      %489 = vmatprep.subr.mxu0 0.0
      %490 = vmatpush2.msra.mxu0 0.0
      %491 = vmatprep.subr.mxu0 0.0
      %492 = vmatpush2.msra.mxu0 0.0
      %493 = vmatprep.subr.mxu0 0.0
      %494 = vmatpush2.msra.mxu0 0.0
      %495 = vmatprep.subr.mxu0 0.0
      %496 = vmatpush2.msra.mxu0 0.0
      %497 = vmatprep.mubr.f32.mxu0 0.0
      %498 = vmatmul.mubr.f32.gmra.mxu0 %v432
      %v499 = vpop.f32.mrf.mxu0
      %v500 = vadd.f32 0.0, %v499
      %v501 = vpop.f32.mrf.mxu0
      %502 = vdwg.mxu0
      %v504 = vrot.slane %v500, 6
      %v506 = vadd.f32 %v324, %v504
      %v507 = vtanh.pop %v506
      %v508 = vmul.f32 %v507, %v61
      %v509 = vadd.f32 %v508, %v62
      %v511 = vrot.slane %v509, 2
      %513 = vrot.lane.b32.xlu0 %v511, 32
      %v514 = vpop.permute.xlu0 %513
      %515 = vrot.lane.b32.xlu0 %v511, 96
      %v516 = vpop.permute.xlu0 %515
      %v517 = vmul.f32 %v514, %v516
      %v519 = vrot.slane %v428, 6
      %v521 = vmul.f32 %v509, %v519
      %v523 = vrot.slane %v517, 6
      %v525 = vadd.f32 %v521, %v523
      %v526 = vtanh.pop %v525
      %v528 = vrot.slane %v526, 2
      %530 = vrot.lane.b32.xlu0 %v528, 64
      %v531 = vpop.permute.xlu0 %530
      %v533 = vrot.slane %v531, 6
      %v535 = vmul.f32 %v509, %v533
      %v537 = vrot.slane %v535, 2
      %539 = vmatprep.subr.mxu0 0.0
      %540 = vmatpush1.msra.mxu0 %v55
      %541 = vmatprep.subr.mxu0 0.0
      %542 = vmatpush1.msra.mxu0 %v54
      %543 = vmatprep.subr.mxu0 0.0
      %544 = vmatpush1.msra.mxu0 %v53
      %545 = vmatprep.subr.mxu0 0.0
      %546 = vmatpush1.msra.mxu0 %v52
      %547 = vmatprep.subr.mxu0 0.0
      %548 = vmatpush1.msra.mxu0 %v51
      %549 = vmatprep.subr.mxu0 0.0
      %550 = vmatpush1.msra.mxu0 %v50
      %551 = vmatprep.subr.mxu0 0.0
      %552 = vmatpush1.msra.mxu0 %v49
      %553 = vmatprep.subr.mxu0 0.0
      %554 = vmatpush1.msra.mxu0 %v48
      %555 = vmatprep.subr.mxu0 0.0
      %556 = vmatpush1.msra.mxu0 %v47
      %557 = vmatprep.subr.mxu0 0.0
      %558 = vmatpush1.msra.mxu0 %v46
      %559 = vmatprep.subr.mxu0 0.0
      %560 = vmatpush1.msra.mxu0 %v45
      %561 = vmatprep.subr.mxu0 0.0
      %562 = vmatpush1.msra.mxu0 %v44
      %563 = vmatprep.subr.mxu0 0.0
      %564 = vmatpush1.msra.mxu0 %v43
      %565 = vmatprep.subr.mxu0 0.0
      %566 = vmatpush1.msra.mxu0 %v42
      %567 = vmatprep.subr.mxu0 0.0
      %568 = vmatpush1.msra.mxu0 %v41
      %569 = vmatprep.subr.mxu0 0.0
      %570 = vmatpush1.msra.mxu0 %v40
      %571 = vmatprep.subr.mxu0 0.0
      %572 = vmatpush2.msra.mxu0 0.0
      %573 = vmatprep.subr.mxu0 0.0
      %574 = vmatpush2.msra.mxu0 0.0
      %575 = vmatprep.subr.mxu0 0.0
      %576 = vmatpush2.msra.mxu0 0.0
      %577 = vmatprep.subr.mxu0 0.0
      %578 = vmatpush2.msra.mxu0 0.0
      %579 = vmatprep.subr.mxu0 0.0
      %580 = vmatpush2.msra.mxu0 0.0
      %581 = vmatprep.subr.mxu0 0.0
      %582 = vmatpush2.msra.mxu0 0.0
      %583 = vmatprep.subr.mxu0 0.0
      %584 = vmatpush2.msra.mxu0 0.0
      %585 = vmatprep.subr.mxu0 0.0
      %586 = vmatpush2.msra.mxu0 0.0
      %587 = vmatprep.subr.mxu0 0.0
      %588 = vmatpush2.msra.mxu0 0.0
      %589 = vmatprep.subr.mxu0 0.0
      %590 = vmatpush2.msra.mxu0 0.0
      %591 = vmatprep.subr.mxu0 0.0
      %592 = vmatpush2.msra.mxu0 0.0
      %593 = vmatprep.subr.mxu0 0.0
      %594 = vmatpush2.msra.mxu0 0.0
      %595 = vmatprep.subr.mxu0 0.0
      %596 = vmatpush2.msra.mxu0 0.0
      %597 = vmatprep.subr.mxu0 0.0
      %598 = vmatpush2.msra.mxu0 0.0
      %599 = vmatprep.subr.mxu0 0.0
      %600 = vmatpush2.msra.mxu0 0.0
      %601 = vmatprep.subr.mxu0 0.0
      %602 = vmatpush2.msra.mxu0 0.0
      %603 = vmatprep.mubr.f32.mxu0 0.0
      %604 = vmatmul.mubr.f32.gmra.mxu0 %v537
      %v605 = vpop.f32.mrf.mxu0
      %v606 = vadd.f32 0.0, %v605
      %v607 = vpop.f32.mrf.mxu0
      %608 = vdwg.mxu0
      %v610 = vrot.slane %v606, 4
      %v612 = vadd.f32 %v324, %v610
      %v613 = vtanh.pop %v612
      %v614 = vmul.f32 %v613, %v61
      %v615 = vadd.f32 %v614, %v62
      %v617 = vrot.slane %v615, 4
      %619 = vrot.lane.b32.xlu0 %v617, 32
      %v620 = vpop.permute.xlu0 %619
      %621 = vrot.lane.b32.xlu0 %v617, 96
      %v622 = vpop.permute.xlu0 %621
      %v623 = vmul.f32 %v620, %v622
      %v625 = vrot.slane %v525, 6
      %v627 = vmul.f32 %v615, %v625
      %v629 = vrot.slane %v623, 4
      %v631 = vadd.f32 %v627, %v629
      %v632 = vtanh.pop %v631
      %v634 = vrot.slane %v632, 4
      %636 = vrot.lane.b32.xlu0 %v634, 64
      %v637 = vpop.permute.xlu0 %636
      %v639 = vrot.slane %v637, 4
      %v641 = vmul.f32 %v615, %v639
      %v643 = vrot.slane %v641, 4
      %645 = vmatprep.subr.mxu0 0.0
      %646 = vmatpush1.msra.mxu0 %v55
      %647 = vmatprep.subr.mxu0 0.0
      %648 = vmatpush1.msra.mxu0 %v54
      %649 = vmatprep.subr.mxu0 0.0
      %650 = vmatpush1.msra.mxu0 %v53
      %651 = vmatprep.subr.mxu0 0.0
      %652 = vmatpush1.msra.mxu0 %v52
      %653 = vmatprep.subr.mxu0 0.0
      %654 = vmatpush1.msra.mxu0 %v51
      %655 = vmatprep.subr.mxu0 0.0
      %656 = vmatpush1.msra.mxu0 %v50
      %657 = vmatprep.subr.mxu0 0.0
      %658 = vmatpush1.msra.mxu0 %v49
      %659 = vmatprep.subr.mxu0 0.0
      %660 = vmatpush1.msra.mxu0 %v48
      %661 = vmatprep.subr.mxu0 0.0
      %662 = vmatpush1.msra.mxu0 %v47
      %663 = vmatprep.subr.mxu0 0.0
      %664 = vmatpush1.msra.mxu0 %v46
      %665 = vmatprep.subr.mxu0 0.0
      %666 = vmatpush1.msra.mxu0 %v45
      %667 = vmatprep.subr.mxu0 0.0
      %668 = vmatpush1.msra.mxu0 %v44
      %669 = vmatprep.subr.mxu0 0.0
      %670 = vmatpush1.msra.mxu0 %v43
      %671 = vmatprep.subr.mxu0 0.0
      %672 = vmatpush1.msra.mxu0 %v42
      %673 = vmatprep.subr.mxu0 0.0
      %674 = vmatpush1.msra.mxu0 %v41
      %675 = vmatprep.subr.mxu0 0.0
      %676 = vmatpush1.msra.mxu0 %v40
      %677 = vmatprep.subr.mxu0 0.0
      %678 = vmatpush2.msra.mxu0 0.0
      %679 = vmatprep.subr.mxu0 0.0
      %680 = vmatpush2.msra.mxu0 0.0
      %681 = vmatprep.subr.mxu0 0.0
      %682 = vmatpush2.msra.mxu0 0.0
      %683 = vmatprep.subr.mxu0 0.0
      %684 = vmatpush2.msra.mxu0 0.0
      %685 = vmatprep.subr.mxu0 0.0
      %686 = vmatpush2.msra.mxu0 0.0
      %687 = vmatprep.subr.mxu0 0.0
      %688 = vmatpush2.msra.mxu0 0.0
      %689 = vmatprep.subr.mxu0 0.0
      %690 = vmatpush2.msra.mxu0 0.0
      %691 = vmatprep.subr.mxu0 0.0
      %692 = vmatpush2.msra.mxu0 0.0
      %693 = vmatprep.subr.mxu0 0.0
      %694 = vmatpush2.msra.mxu0 0.0
      %695 = vmatprep.subr.mxu0 0.0
      %696 = vmatpush2.msra.mxu0 0.0
      %697 = vmatprep.subr.mxu0 0.0
      %698 = vmatpush2.msra.mxu0 0.0
      %699 = vmatprep.subr.mxu0 0.0
      %700 = vmatpush2.msra.mxu0 0.0
      %701 = vmatprep.subr.mxu0 0.0
      %702 = vmatpush2.msra.mxu0 0.0
      %703 = vmatprep.subr.mxu0 0.0
      %704 = vmatpush2.msra.mxu0 0.0
      %705 = vmatprep.subr.mxu0 0.0
      %706 = vmatpush2.msra.mxu0 0.0
      %707 = vmatprep.subr.mxu0 0.0
      %708 = vmatpush2.msra.mxu0 0.0
      %709 = vmatprep.mubr.f32.mxu0 0.0
      %710 = vmatmul.mubr.f32.gmra.mxu0 %v643
      %v711 = vpop.f32.mrf.mxu0
      %v712 = vadd.f32 0.0, %v711
      %v713 = vpop.f32.mrf.mxu0
      %714 = vdwg.mxu0
      %v716 = vrot.slane %v712, 2
      %v718 = vadd.f32 %v324, %v716
      %v719 = vtanh.pop %v718
      %v720 = vmul.f32 %v719, %v61
      %v721 = vadd.f32 %v720, %v62
      %v723 = vrot.slane %v721, 6
      %725 = vrot.lane.b32.xlu0 %v723, 32
      %v726 = vpop.permute.xlu0 %725
      %727 = vrot.lane.b32.xlu0 %v723, 96
      %v728 = vpop.permute.xlu0 %727
      %v729 = vmul.f32 %v726, %v728
      %v731 = vrot.slane %v631, 6
      %v733 = vmul.f32 %v721, %v731
      %v735 = vrot.slane %v729, 2
      %v737 = vadd.f32 %v733, %v735
      %v738 = vtanh.pop %v737
      %v740 = vrot.slane %v738, 6
      %742 = vrot.lane.b32.xlu0 %v740, 64
      %v743 = vpop.permute.xlu0 %742
      %v745 = vrot.slane %v743, 2
      %v747 = vmul.f32 %v721, %v745
      %vm748 = vcmask 1041408
      %v749 = vsel %vm748, %v432, %v535
      %v750 = vsel %vm149, %v749, %v641
      %vm751 = vcmask 1045504
      %v752 = vsel %vm751, %v750, %v747
      %v753 = vlaneseq
      %v754 = vshrl.u32 %v753, 7
      %v755 = vsub.s32 0, %v754
      %v756 = vrot.slane %v341, %v755
      %757 = vmatprep.subr.mxu0 0.0
      %758 = vmatpush1.msra.mxu0 %v340
      %759 = vmatprep.subr.mxu0 0.0
      %760 = vmatpush1.msra.mxu0 %v339
      %761 = vmatprep.subr.mxu0 0.0
      %762 = vmatpush1.msra.mxu0 %v338
      %763 = vmatprep.subr.mxu0 0.0
      %764 = vmatpush1.msra.mxu0 %v337
      %765 = vmatprep.subr.mxu0 0.0
      %766 = vmatpush1.msra.mxu0 %v336
      %767 = vmatprep.subr.mxu0 0.0
      %768 = vmatpush1.msra.mxu0 %v335
      %769 = vmatprep.subr.mxu0 0.0
      %770 = vmatpush1.msra.mxu0 %v334
      %771 = vmatprep.subr.mxu0 0.0
      %772 = vmatpush1.msra.mxu0 %v333
      %773 = vmatprep.subr.mxu0 0.0
      %774 = vmatpush1.msra.mxu0 %v332
      %775 = vmatprep.subr.mxu0 0.0
      %776 = vmatpush1.msra.mxu0 %v331
      %777 = vmatprep.subr.mxu0 0.0
      %778 = vmatpush1.msra.mxu0 %v330
      %779 = vmatprep.subr.mxu0 0.0
      %780 = vmatpush1.msra.mxu0 %v329
      %781 = vmatprep.subr.mxu0 0.0
      %782 = vmatpush1.msra.mxu0 %v328
      %783 = vmatprep.subr.mxu0 0.0
      %784 = vmatpush1.msra.mxu0 %v327
      %785 = vmatprep.subr.mxu0 0.0
      %786 = vmatpush1.msra.mxu0 %v326
      %787 = vmatprep.subr.mxu0 0.0
      %788 = vmatpush1.msra.mxu0 %v325
      %789 = vmatprep.subr.mxu0 0.0
      %790 = vmatpush2.msra.mxu0 0.0
      %791 = vmatprep.subr.mxu0 0.0
      %792 = vmatpush2.msra.mxu0 0.0
      %793 = vmatprep.subr.mxu0 0.0
      %794 = vmatpush2.msra.mxu0 0.0
      %795 = vmatprep.subr.mxu0 0.0
      %796 = vmatpush2.msra.mxu0 0.0
      %797 = vmatprep.subr.mxu0 0.0
      %798 = vmatpush2.msra.mxu0 0.0
      %799 = vmatprep.subr.mxu0 0.0
      %800 = vmatpush2.msra.mxu0 0.0
      %801 = vmatprep.subr.mxu0 0.0
      %802 = vmatpush2.msra.mxu0 0.0
      %803 = vmatprep.subr.mxu0 0.0
      %804 = vmatpush2.msra.mxu0 0.0
      %805 = vmatprep.subr.mxu0 0.0
      %806 = vmatpush2.msra.mxu0 0.0
      %807 = vmatprep.subr.mxu0 0.0
      %808 = vmatpush2.msra.mxu0 0.0
      %809 = vmatprep.subr.mxu0 0.0
      %810 = vmatpush2.msra.mxu0 0.0
      %811 = vmatprep.subr.mxu0 0.0
      %812 = vmatpush2.msra.mxu0 0.0
      %813 = vmatprep.subr.mxu0 0.0
      %814 = vmatpush2.msra.mxu0 0.0
      %815 = vmatprep.subr.mxu0 0.0
      %816 = vmatpush2.msra.mxu0 0.0
      %817 = vmatprep.subr.mxu0 0.0
      %818 = vmatpush2.msra.mxu0 0.0
      %819 = vmatprep.subr.mxu0 0.0
      %820 = vmatpush2.msra.mxu0 0.0
      %821 = vmatprep.mubr.f32.mxu0 0.0
      %822 = vmatmul.mubr.f32.gmra.mxu0 %v752
      %v823 = vpop.f32.mrf.mxu0
      %v824 = vadd.f32 %v756, %v823
      %v825 = vpop.f32.mrf.mxu0
      %826 = vdwg.mxu0
      %v827 = vmax.f32 %v824, 0.0
      %s828 = scalar_lea.vmem [#allocation3], %s322
      %829 = vst [vmem:[%s828] sm:$0xff] %v827
    $region22: #{tpu_custom_call.1} parent=1 // loop_footer
      %s319 = sadd.s32 1, %s315
    $region23: #{tpu_custom_call.1} parent=1 // loop_footer_branch
      %314 = sbr.rel target = $region19
    $region24: #{tpu_custom_call.1} parent=1 // loop_exit
      _
    %v830 = vld [vmem:[#allocation7 + $0x118] sm:$0xff]
    %v831 = vld [vmem:[#allocation7 + $0x120] sm:$0xf]
    %v832 = vld [vmem:[#allocation3] sm:$0xff]
    %v833 = vld [vmem:[#allocation3 + $0x8] sm:$0xff]
    %v834 = vld [vmem:[#allocation3 + $0x10] sm:$0xff]
    %v835 = vld [vmem:[#allocation3 + $0x18] sm:$0xff]
    %v836 = vld [vmem:[#allocation3 + $0x20] sm:$0xff]
    %v837 = vld [vmem:[#allocation3 + $0x28] sm:$0xff]
    %v838 = vld [vmem:[#allocation3 + $0x30] sm:$0xff]
    %v839 = vld [vmem:[#allocation3 + $0x38] sm:$0xff]
    %v840 = vld [vmem:[#allocation3 + $0x40] sm:$0xff]
    %v841 = vld [vmem:[#allocation3 + $0x48] sm:$0xff]
    %v842 = vld [vmem:[#allocation3 + $0x50] sm:$0xff]
    %v843 = vld [vmem:[#allocation3 + $0x58] sm:$0xff]
    %v844 = vld [vmem:[#allocation3 + $0x60] sm:$0xff]
    %v845 = vld [vmem:[#allocation3 + $0x68] sm:$0xff]
    %v846 = vld [vmem:[#allocation3 + $0x70] sm:$0xff]
    %v847 = vld [vmem:[#allocation3 + $0x78] sm:$0xff]
    %848 = vmatprep.subr.mxu0 0.0
    %849 = vmatpush1.xpose.msra.mxu0 %v847
    %850 = vmatprep.subr.mxu0 0.0
    %851 = vmatpush1.xpose.msra.mxu0 %v846
    %852 = vmatprep.subr.mxu0 0.0
    %853 = vmatpush1.xpose.msra.mxu0 %v845
    %854 = vmatprep.subr.mxu0 0.0
    %855 = vmatpush1.xpose.msra.mxu0 %v844
    %856 = vmatprep.subr.mxu0 0.0
    %857 = vmatpush1.xpose.msra.mxu0 %v843
    %858 = vmatprep.subr.mxu0 0.0
    %859 = vmatpush1.xpose.msra.mxu0 %v842
    %860 = vmatprep.subr.mxu0 0.0
    %861 = vmatpush1.xpose.msra.mxu0 %v841
    %862 = vmatprep.subr.mxu0 0.0
    %863 = vmatpush1.xpose.msra.mxu0 %v840
    %864 = vmatprep.subr.mxu0 0.0
    %865 = vmatpush1.xpose.msra.mxu0 %v839
    %866 = vmatprep.subr.mxu0 0.0
    %867 = vmatpush1.xpose.msra.mxu0 %v838
    %868 = vmatprep.subr.mxu0 0.0
    %869 = vmatpush1.xpose.msra.mxu0 %v837
    %870 = vmatprep.subr.mxu0 0.0
    %871 = vmatpush1.xpose.msra.mxu0 %v836
    %872 = vmatprep.subr.mxu0 0.0
    %873 = vmatpush1.xpose.msra.mxu0 %v835
    %874 = vmatprep.subr.mxu0 0.0
    %875 = vmatpush1.xpose.msra.mxu0 %v834
    %876 = vmatprep.subr.mxu0 0.0
    %877 = vmatpush1.xpose.msra.mxu0 %v833
    %878 = vmatprep.subr.mxu0 0.0
    %879 = vmatpush1.xpose.msra.mxu0 %v832
    %880 = vmatprep.subr.mxu0 0.0
    %881 = vmatpush2.xpose.msra.mxu0 0.0
    %882 = vmatprep.subr.mxu0 0.0
    %883 = vmatpush2.xpose.msra.mxu0 0.0
    %884 = vmatprep.subr.mxu0 0.0
    %885 = vmatpush2.xpose.msra.mxu0 0.0
    %886 = vmatprep.subr.mxu0 0.0
    %887 = vmatpush2.xpose.msra.mxu0 0.0
    %888 = vmatprep.subr.mxu0 0.0
    %889 = vmatpush2.xpose.msra.mxu0 0.0
    %890 = vmatprep.subr.mxu0 0.0
    %891 = vmatpush2.xpose.msra.mxu0 0.0
    %892 = vmatprep.subr.mxu0 0.0
    %893 = vmatpush2.xpose.msra.mxu0 0.0
    %894 = vmatprep.subr.mxu0 0.0
    %895 = vmatpush2.xpose.msra.mxu0 0.0
    %896 = vmatprep.subr.mxu0 0.0
    %897 = vmatpush2.xpose.msra.mxu0 0.0
    %898 = vmatprep.subr.mxu0 0.0
    %899 = vmatpush2.xpose.msra.mxu0 0.0
    %900 = vmatprep.subr.mxu0 0.0
    %901 = vmatpush2.xpose.msra.mxu0 0.0
    %902 = vmatprep.subr.mxu0 0.0
    %903 = vmatpush2.xpose.msra.mxu0 0.0
    %904 = vmatprep.subr.mxu0 0.0
    %905 = vmatpush2.xpose.msra.mxu0 0.0
    %906 = vmatprep.subr.mxu0 0.0
    %907 = vmatpush2.xpose.msra.mxu0 0.0
    %908 = vmatprep.subr.mxu0 0.0
    %909 = vmatpush2.xpose.msra.mxu0 0.0
    %910 = vmatprep.subr.mxu0 0.0
    %911 = vmatpush2.xpose.msra.mxu0 0.0
    %912 = vmatprep.mubr.f32.mxu0 0.0
    %913 = vmatmul.mubr.f32.gmra.mxu0 %v830
    %v914 = vpop.f32.mrf.mxu0
    %v915 = vadd.f32 0.0, %v914
    %v916 = vpop.f32.mrf.mxu0
    %917 = vmatprep.mubr.f32.mxu0 0.0
    %918 = vmatmul.mubr.f32.gmra.mxu0 %v831
    %v919 = vpop.f32.mrf.mxu0
    %v920 = vadd.f32 0.0, %v919
    %v921 = vpop.f32.mrf.mxu0
    %922 = vdwg.mxu0
    %923 = vst [vmem:[#allocation9] sm:$0xff] %v915
    %924 = vst [vmem:[#allocation9 + $0x8] sm:$0xf] %v920
    // Predicated region
    $region25: #{tpu_custom_call.1} parent=1 // pred_check
      _
    $region26: #{tpu_custom_call.1} parent=1 // pred_check_branch
      %926 = sbr.rel (0) target = $region28
    $region27: #{tpu_custom_call.1} parent=1 // pred_region
      %s928 = ssub.s32 256, 256
      %929 = vsyncadd [#allocation6], %s928
      %s930 = sshll.u32 [#allocation9], 4
      %s931 = int_to_ptr.vmem [resolvable:$true] %s930
      %936 = dma.vmem_to_hbm [thread:$0]  %s931, 256, %s2, [#allocation6], 128, 128, 8
    $region28: #{tpu_custom_call.1} parent=1 // pred_fallthru
      _
    // Predicated region
    $region29: #{tpu_custom_call.1} parent=1 // pred_check
      _
    $region30: #{tpu_custom_call.1} parent=1 // pred_check_branch
      %938 = sbr.rel (0) target = $region32
    $region31: #{tpu_custom_call.1} parent=1 // pred_region
      %939 = dma.done [#allocation6], 256
    $region32: #{tpu_custom_call.1} parent=1 // pred_fallthru
      _
    %940 = vsyncpa [#allocation5], 1
    %941 = vsyncpa [#allocation8], 1
    %942 = vsyncpa [#allocation6], 1

</llo_original>
